<compile_context>
chip_gen: v7x
topology: tpu7x:2x2x1
jax: 0.10.0
libtpu: 0.0.40
codegen_flags: <defaults>
</compile_context>

<pallas_src>
import functools
import math

import jax
import jax.numpy as jnp
import numpy as np
from jax.experimental import pallas as pl
from jax.experimental.pallas import tpu as pltpu


# ----------------------------------------------------------------------------
# Host-side constant construction (one-time, not per-call work).
# ----------------------------------------------------------------------------
def make_dct_matrix(n: int) -> np.ndarray:
    """M such that x @ M == torch-dct dct(x, norm=None) along the last dim.

    dct(x)[k] = 2 * sum_n x[n] * cos(pi * (2n+1) * k / (2N))   (norm=None)
    """
    i = np.arange(n, dtype=np.float64)[:, None]   # sample index
    k = np.arange(n, dtype=np.float64)[None, :]   # frequency index
    return 2.0 * np.cos(np.pi * (2.0 * i + 1.0) * k / (2.0 * n))


def fold_dct_into_fc1(w1: jax.Array) -> jax.Array:
    """Return (DCT_matrix @ W1) so the kernel computes dct(x) @ W1 as one matmul."""
    L = w1.shape[0]
    folded = make_dct_matrix(L) @ np.asarray(w1, dtype=np.float64)
    return jnp.asarray(folded, dtype=jnp.float32)


# ----------------------------------------------------------------------------
# Kernel: whole forward for one row slab, everything in VMEM.
# ----------------------------------------------------------------------------
def dct_channel_block_kernel(x_ref, w1d_ref, w2_ref, gb_ref, out_ref, *,
                             matmul_dtype=jnp.float32):
    x = x_ref[...]                                                       # (TR, L) f32

    # dct(x) @ W1, with the DCT matrix pre-folded into the weight host-side.
    # Optional bf16 cast on MXU inputs only; accumulation stays f32.
    h = jnp.dot(x.astype(matmul_dtype), w1d_ref[...].astype(matmul_dtype),
                preferred_element_type=jnp.float32)                      # (TR, 2L)
    # Dropout(p=0.1) is identity in eval mode; ReLU on the VPU.
    h = jnp.maximum(h, 0.0)

    # Second Linear (no bias) + Sigmoid (EUP).
    z = jnp.dot(h.astype(matmul_dtype), w2_ref[...].astype(matmul_dtype),
                preferred_element_type=jnp.float32)                      # (TR, L)
    s = jax.nn.sigmoid(z)

    # LayerNorm([L], eps=1e-6) over the last dim with affine params (all f32 on VPU).
    mean = jnp.mean(s, axis=-1, keepdims=True)
    cen = s - mean
    var = jnp.mean(cen * cen, axis=-1, keepdims=True)
    g = gb_ref[0:1, :]                                                   # static slice
    b = gb_ref[1:2, :]                                                   # static slice
    lr_weight = cen * jax.lax.rsqrt(var + 1e-6) * g + b

    # Frequency/channel gating of the ORIGINAL input.
    out_ref[...] = (x * lr_weight).astype(out_ref.dtype)


# ----------------------------------------------------------------------------
# Wrapper.
# ----------------------------------------------------------------------------
def dct_channel_block_forward(x, w1_dct, w2, gamma_beta, *, row_tile=None,
                              matmul_dtype=jnp.float32, donate_x=False):
    """x: (B, C, L) f32.  w1_dct: (L, 2L) (DCT pre-folded).  w2: (2L, L).
    gamma_beta: (2, L) stacked LayerNorm affine params.  Returns (B, C, L).

    row_tile=None  -> single gridless fused call (optimal at small B*C).
    row_tile=tr    -> 1-D "parallel" grid over row tiles of size tr (large B*C).
    matmul_dtype   -> jnp.bfloat16 to use native MXU inputs at scale (f32 accum).
    """
    B, C, L = x.shape
    R = B * C
    x2d = x.reshape(R, L)                       # free, contiguous reshape

    kernel = functools.partial(dct_channel_block_kernel, matmul_dtype=matmul_dtype)
    common = dict(out_shape=jax.ShapeDtypeStruct((R, L), x.dtype))
    if donate_x:
        # Caller promises not to use x afterwards; avoids a second R x L HBM buffer.
        common["input_output_aliases"] = {0: 0}

    if row_tile is None:
        # One fused step: no grid -> no pipeline prologue/epilogue, no per-step
        # index_map evaluation, no double buffers.  All operands whole-array in VMEM.
        out2d = pl.pallas_call(
            kernel,
            in_specs=[pl.BlockSpec(memory_space=pltpu.MemorySpace.VMEM)] * 4,
            out_specs=pl.BlockSpec(memory_space=pltpu.MemorySpace.VMEM),
            **common,
        )(x2d, w1_dct, w2, gamma_beta)
    else:
        tr = row_tile
        sub = 16 if matmul_dtype == jnp.bfloat16 else 8   # bf16 packs 2 rows/sublane
        assert R % tr == 0 and tr % sub == 0, (R, tr, sub)
        out2d = pl.pallas_call(
            kernel,
            grid=(R // tr,),
            in_specs=[
                pl.BlockSpec((tr, L), lambda i: (i, 0)),       # x rows (streamed)
                pl.BlockSpec((L, 2 * L), lambda i: (0, 0)),    # folded DCT@W1 (resident)
                pl.BlockSpec((2 * L, L), lambda i: (0, 0)),    # W2 (resident)
                pl.BlockSpec((2, L), lambda i: (0, 0)),        # LayerNorm gamma/beta
            ],
            out_specs=pl.BlockSpec((tr, L), lambda i: (i, 0)),
            compiler_params=pltpu.CompilerParams(
                dimension_semantics=("parallel",)),   # row tiles are independent
            **common,
        )(x2d, w1_dct, w2, gamma_beta)

    return out2d.reshape(B, C, L)


# ----------------------------------------------------------------------------
# Pure-JAX reference mirroring the PyTorch forward (DCT via the even/odd + FFT
# trick, exactly like torch-dct), unfused, HIGHEST-precision matmuls.
# ----------------------------------------------------------------------------
def dct_ref(x):
    N = x.shape[-1]
    v = jnp.concatenate([x[..., ::2], x[..., 1::2][..., ::-1]], axis=-1)
    Vc = jnp.fft.fft(v, axis=-1)
    k = -jnp.arange(N, dtype=x.dtype) * jnp.pi / (2.0 * N)
    V = Vc.real * jnp.cos(k) - Vc.imag * jnp.sin(k)
    return 2.0 * V


def reference_forward(x, w1, w2, gamma, beta):
    freq = dct_ref(x)                                                   # (B, C, L)
    h = jnp.maximum(jnp.dot(freq, w1, precision=jax.lax.Precision.HIGHEST), 0.0)
    s = jax.nn.sigmoid(jnp.dot(h, w2, precision=jax.lax.Precision.HIGHEST))
    mean = jnp.mean(s, axis=-1, keepdims=True)
    var = jnp.mean((s - mean) ** 2, axis=-1, keepdims=True)
    lr_weight = (s - mean) / jnp.sqrt(var + 1e-6) * gamma + beta
    return x * lr_weight


if __name__ == "__main__":
    # The module hard-codes LayerNorm([64]) and applies Linear(channel, 2*channel)
    # to the last dim, so channel == L == 64.  B and C (data channels) stay small.
    B, C, L = 2, 4, 64

    key = jax.random.PRNGKey(0)
    kx, k1, k2, k3, k4 = jax.random.split(key, 5)

    x = jax.random.normal(kx, (B, C, L), dtype=jnp.float32)

    # Synthetic deterministic parameters.  Linear weights stored (in, out) so that
    # y = x @ W (transpose of PyTorch's nn.Linear.weight).
    w1 = jax.random.normal(k1, (L, 2 * L), dtype=jnp.float32) / math.sqrt(L)
    w2 = jax.random.normal(k2, (2 * L, L), dtype=jnp.float32) / math.sqrt(2 * L)
    gamma = 1.0 + 0.1 * jax.random.normal(k3, (1, L), dtype=jnp.float32)
    beta = 0.1 * jax.random.normal(k4, (1, L), dtype=jnp.float32)

    # One-time host-side constant folds:
    #   dct(x) @ W1 == x @ (DCT_matrix @ W1); gamma/beta stacked into one operand.
    w1_dct = fold_dct_into_fc1(w1)
    gamma_beta = jnp.concatenate([gamma, beta], axis=0)                 # (2, L)

    ref = reference_forward(x, w1, w2, gamma, beta)

    # Default path: gridless single fused step (optimal at this shape).
    out = dct_channel_block_forward(x, w1_dct, w2, gamma_beta)
    out = jax.block_until_ready(out)
    np.testing.assert_allclose(np.asarray(out), np.asarray(ref), rtol=2e-3, atol=2e-3)

    # Scaling path sanity check: tiled "parallel" grid over rows (tr = 8 here).
    out_tiled = dct_channel_block_forward(x, w1_dct, w2, gamma_beta, row_tile=8)
    out_tiled = jax.block_until_ready(out_tiled)
    np.testing.assert_allclose(np.asarray(out_tiled), np.asarray(ref),
                               rtol=2e-3, atol=2e-3)

    print("KERNEL_OK")
</pallas_src>

<mosaic_0001>
module attributes {stable_mosaic.version = 11 : i64} {
  func.func @dct_channel_block_kernel(%arg0: memref<8x64xf32, #tpu.memory_space<vmem>>, %arg1: memref<64x128xf32, #tpu.memory_space<vmem>>, %arg2: memref<128x64xf32, #tpu.memory_space<vmem>>, %arg3: memref<2x64xf32, #tpu.memory_space<vmem>>, %arg4: memref<8x64xf32, #tpu.memory_space<vmem>>) attributes {dimension_semantics = [], scalar_prefetch = 0 : i64, scratch_operands = 0 : i64, tpu.core_type = #tpu.core_type<tc>} {
    %c0 = arith.constant 0 : index
    %c0_0 = arith.constant 0 : index
    %0 = vector.load %arg0[%c0, %c0_0] : memref<8x64xf32, #tpu.memory_space<vmem>>, vector<8x64xf32>
    %c0_1 = arith.constant 0 : index
    %c0_2 = arith.constant 0 : index
    %1 = vector.load %arg1[%c0_1, %c0_2] : memref<64x128xf32, #tpu.memory_space<vmem>>, vector<64x128xf32>
    %cst = arith.constant dense<0.000000e+00> : vector<8x128xf32>
    %2 = tpu.matmul %0, %1, %cst {dimension_numbers = #tpu.dot_dimension_numbers<[1], [0], [0], [1], [0, 0, 1, 1], [], []>} : vector<8x64xf32>, vector<64x128xf32>, vector<8x128xf32> -> vector<8x128xf32>
    %cst_3 = arith.constant 0.000000e+00 : f32
    %3 = vector.broadcast %cst_3 : f32 to vector<8x128xf32>
    %4 = arith.maximumf %2, %3 : vector<8x128xf32>
    %c0_4 = arith.constant 0 : index
    %c0_5 = arith.constant 0 : index
    %5 = vector.load %arg2[%c0_4, %c0_5] : memref<128x64xf32, #tpu.memory_space<vmem>>, vector<128x64xf32>
    %cst_6 = arith.constant dense<0.000000e+00> : vector<8x64xf32>
    %6 = tpu.matmul %4, %5, %cst_6 {dimension_numbers = #tpu.dot_dimension_numbers<[1], [0], [0], [1], [0, 0, 1, 1], [], []>} : vector<8x128xf32>, vector<128x64xf32>, vector<8x64xf32> -> vector<8x64xf32>
    %7 = arith.negf %6 : vector<8x64xf32>
    %8 = math.exp %7 : vector<8x64xf32>
    %cst_7 = arith.constant 1.000000e+00 : f32
    %9 = vector.broadcast %cst_7 : f32 to vector<8x64xf32>
    %10 = arith.addf %9, %8 : vector<8x64xf32>
    %11 = arith.divf %9, %10 : vector<8x64xf32>
    %cst_8 = arith.constant dense<0.000000e+00> : vector<8xf32>
    %12 = vector.multi_reduction <add>, %11, %cst_8 [1] : vector<8x64xf32> to vector<8xf32>
    %13 = vector.shape_cast %12 : vector<8xf32> to vector<8x1xf32>
    %cst_9 = arith.constant 6.400000e+01 : f32
    %14 = vector.broadcast %cst_9 : f32 to vector<8x1xf32>
    %15 = arith.divf %13, %14 : vector<8x1xf32>
    %16 = vector.broadcast %15 : vector<8x1xf32> to vector<8x64xf32>
    %17 = arith.subf %11, %16 : vector<8x64xf32>
    %18 = arith.mulf %17, %17 : vector<8x64xf32>
    %cst_10 = arith.constant dense<0.000000e+00> : vector<8xf32>
    %19 = vector.multi_reduction <add>, %18, %cst_10 [1] : vector<8x64xf32> to vector<8xf32>
    %20 = vector.shape_cast %19 : vector<8xf32> to vector<8x1xf32>
    %cst_11 = arith.constant 6.400000e+01 : f32
    %21 = vector.broadcast %cst_11 : f32 to vector<8x1xf32>
    %22 = arith.divf %20, %21 : vector<8x1xf32>
    %c0_12 = arith.constant 0 : index
    %c0_13 = arith.constant 0 : index
    %23 = vector.load %arg3[%c0_12, %c0_13] : memref<2x64xf32, #tpu.memory_space<vmem>>, vector<1x64xf32>
    %c1 = arith.constant 1 : index
    %c0_14 = arith.constant 0 : index
    %24 = vector.load %arg3[%c1, %c0_14] : memref<2x64xf32, #tpu.memory_space<vmem>>, vector<1x64xf32>
    %cst_15 = arith.constant 9.99999997E-7 : f32
    %25 = vector.broadcast %cst_15 : f32 to vector<8x1xf32>
    %26 = arith.addf %22, %25 : vector<8x1xf32>
    %27 = math.rsqrt %26 : vector<8x1xf32>
    %28 = vector.broadcast %27 : vector<8x1xf32> to vector<8x64xf32>
    %29 = arith.mulf %17, %28 : vector<8x64xf32>
    %30 = vector.broadcast %23 : vector<1x64xf32> to vector<8x64xf32>
    %31 = arith.mulf %29, %30 : vector<8x64xf32>
    %32 = vector.broadcast %24 : vector<1x64xf32> to vector<8x64xf32>
    %33 = arith.addf %31, %32 : vector<8x64xf32>
    %34 = arith.mulf %0, %33 : vector<8x64xf32>
    %c0_16 = arith.constant 0 : index
    %c0_17 = arith.constant 0 : index
    %35 = vector.load %arg4[%c0_16, %c0_17] : memref<8x64xf32, #tpu.memory_space<vmem>>, vector<8x64xf32>
    tpu.vector_store %arg4[%c0_16, %c0_17], %34 {strides = array<i32>} : memref<8x64xf32, #tpu.memory_space<vmem>>, vector<8x64xf32>,
    return
  }
}

</mosaic_0001>

<llo_original>
// kernel: tpu_custom_call.1
$region0: #{tpu_custom_call.1}
  #allocation0 [shape = 'u32[]', space=smem, size = 0x4, offset = 0x4, fixed_abs, tag = 'smem constant byte address 0x4 - core index']
  #allocation1 [shape = 'u32[144,128]{1,0:T(1,128)}', space=vmem, size = 0x12000, scoped, tag = 'internal scratch']
  %s0 = inlined_call_operand.vmem [shape: f32[8,64], index: 0, kind: input, shape index: {}]
  %s1 = inlined_call_operand.vmem [shape: f32[64,128], index: 1, kind: input, shape index: {}]
  %s2 = inlined_call_operand.vmem [shape: f32[128,64], index: 2, kind: input, shape index: {}]
  %s3 = inlined_call_operand.vmem [shape: f32[2,64], index: 3, kind: input, shape index: {}]
  %s4 = inlined_call_operand.hbm [shape: f32[8,64], index: 4, kind: output, shape index: {}]
  %s5 = sld [smem:[#allocation0]]
  $region26: #{tpu_custom_call.1} parent=0
    _
  %s7 = ssub.s32 1, %s5
  %s8 = scalar_select 0, %s7, %s5
  $region1: #{tpu_custom_call.1} parent=0
    #allocation2 [shape = 'u8[4096]{0}', space=vmem, size = 0x1000, scoped, tag = 'output window, operand 0, single buffered']
    #allocation3 [shape = 's32[1]{0}', space=sflag, size = 0x4, scoped, tag = 'scoped memory for tpu_custom_call.1']
    %9 = vsyncpa [#allocation3], 0
    // Predicated region
    $region2: #{tpu_custom_call.1} parent=1 // pred_check
      _
    $region3: #{tpu_custom_call.1} parent=1 // pred_check_branch
      %11 = sbr.rel (0) target = $region5
    $region4: #{tpu_custom_call.1} parent=1 // pred_region
      _
    $region5: #{tpu_custom_call.1} parent=1 // pred_fallthru
      _
    // Predicated region
    $region6: #{tpu_custom_call.1} parent=1 // pred_check
      _
    $region7: #{tpu_custom_call.1} parent=1 // pred_check_branch
      %13 = sbr.rel (0) target = $region9
    $region8: #{tpu_custom_call.1} parent=1 // pred_region
      _
    $region9: #{tpu_custom_call.1} parent=1 // pred_fallthru
      _
    // Predicated region
    $region10: #{tpu_custom_call.1} parent=1 // pred_check
      _
    $region11: #{tpu_custom_call.1} parent=1 // pred_check_branch
      %15 = sbr.rel (0) target = $region13
    $region12: #{tpu_custom_call.1} parent=1 // pred_region
      _
    $region13: #{tpu_custom_call.1} parent=1 // pred_fallthru
      _
    // Predicated region
    $region14: #{tpu_custom_call.1} parent=1 // pred_check
      _
    $region15: #{tpu_custom_call.1} parent=1 // pred_check_branch
      %17 = sbr.rel (0) target = $region17
    $region16: #{tpu_custom_call.1} parent=1 // pred_region
      _
    $region17: #{tpu_custom_call.1} parent=1 // pred_fallthru
      _
    %v18 = vld [vmem:[%s0] sm:$0xff]
    %v19 = vld [vmem:[%s1] sm:$0xff]
    %v20 = vld [vmem:[%s1 + $0x8] sm:$0xff]
    %v21 = vld [vmem:[%s1 + $0x10] sm:$0xff]
    %v22 = vld [vmem:[%s1 + $0x18] sm:$0xff]
    %v23 = vld [vmem:[%s1 + $0x20] sm:$0xff]
    %v24 = vld [vmem:[%s1 + $0x28] sm:$0xff]
    %v25 = vld [vmem:[%s1 + $0x30] sm:$0xff]
    %v26 = vld [vmem:[%s1 + $0x38] sm:$0xff]
    %vm27 = vcmask 523264
    %v29 = vsel %vm27, %v18, 0
    %31 = vmatprep.subr.mxu0 0.0
    %32 = vmatpush1.msra.mxu0 %v19
    %33 = vmatprep.subr.mxu0 0.0
    %34 = vmatpush1.msra.mxu0 %v20
    %35 = vmatprep.subr.mxu0 0.0
    %36 = vmatpush1.msra.mxu0 %v21
    %37 = vmatprep.subr.mxu0 0.0
    %38 = vmatpush1.msra.mxu0 %v22
    %39 = vmatprep.subr.mxu0 0.0
    %40 = vmatpush1.msra.mxu0 %v23
    %41 = vmatprep.subr.mxu0 0.0
    %42 = vmatpush1.msra.mxu0 %v24
    %43 = vmatprep.subr.mxu0 0.0
    %44 = vmatpush1.msra.mxu0 %v25
    %45 = vmatprep.subr.mxu0 0.0
    %46 = vmatpush1.msra.mxu0 %v26
    %47 = vmatprep.subr.mxu0 0.0
    %48 = vmatpush1.msra.mxu0 0.0
    %49 = vmatprep.subr.mxu0 0.0
    %50 = vmatpush1.msra.mxu0 0.0
    %51 = vmatprep.subr.mxu0 0.0
    %52 = vmatpush1.msra.mxu0 0.0
    %53 = vmatprep.subr.mxu0 0.0
    %54 = vmatpush1.msra.mxu0 0.0
    %55 = vmatprep.subr.mxu0 0.0
    %56 = vmatpush1.msra.mxu0 0.0
    %57 = vmatprep.subr.mxu0 0.0
    %58 = vmatpush1.msra.mxu0 0.0
    %59 = vmatprep.subr.mxu0 0.0
    %60 = vmatpush1.msra.mxu0 0.0
    %61 = vmatprep.subr.mxu0 0.0
    %62 = vmatpush1.msra.mxu0 0.0
    %63 = vmatprep.subr.mxu0 0.0
    %64 = vmatpush1.msra.mxu0 0.0
    %65 = vmatprep.subr.mxu0 0.0
    %66 = vmatpush1.msra.mxu0 0.0
    %67 = vmatprep.subr.mxu0 0.0
    %68 = vmatpush1.msra.mxu0 0.0
    %69 = vmatprep.subr.mxu0 0.0
    %70 = vmatpush1.msra.mxu0 0.0
    %71 = vmatprep.subr.mxu0 0.0
    %72 = vmatpush1.msra.mxu0 0.0
    %73 = vmatprep.subr.mxu0 0.0
    %74 = vmatpush1.msra.mxu0 0.0
    %75 = vmatprep.subr.mxu0 0.0
    %76 = vmatpush1.msra.mxu0 0.0
    %77 = vmatprep.subr.mxu0 0.0
    %78 = vmatpush1.msra.mxu0 0.0
    %79 = vmatprep.subr.mxu0 0.0
    %80 = vmatpush1.msra.mxu0 0.0
    %81 = vmatprep.subr.mxu0 0.0
    %82 = vmatpush1.msra.mxu0 0.0
    %83 = vmatprep.subr.mxu0 0.0
    %84 = vmatpush1.msra.mxu0 0.0
    %85 = vmatprep.subr.mxu0 0.0
    %86 = vmatpush1.msra.mxu0 0.0
    %87 = vmatprep.subr.mxu0 0.0
    %88 = vmatpush1.msra.mxu0 0.0
    %89 = vmatprep.subr.mxu0 0.0
    %90 = vmatpush1.msra.mxu0 0.0
    %91 = vmatprep.subr.mxu0 0.0
    %92 = vmatpush1.msra.mxu0 0.0
    %93 = vmatprep.subr.mxu0 0.0
    %94 = vmatpush1.msra.mxu0 0.0
    %95 = vmatprep.mubr.f32.mxu0 0.0
    %96 = vmatmul.mubr.f32.gmra.mrb[0].mxu0 %v29
    %v97 = vpop.f32.mrb[0].mxu0
    %v98 = vadd.f32 0.0, %v97
    %v99 = vpop.f32.mrb[0].mxu0
    %100 = vdwg.mxu0
    %v101 = vmax.f32 %v98, 0.0
    %v102 = vld [vmem:[%s2] sm:$0xff]
    %v103 = vld [vmem:[%s2 + $0x8] sm:$0xff]
    %v104 = vld [vmem:[%s2 + $0x10] sm:$0xff]
    %v105 = vld [vmem:[%s2 + $0x18] sm:$0xff]
    %v106 = vld [vmem:[%s2 + $0x20] sm:$0xff]
    %v107 = vld [vmem:[%s2 + $0x28] sm:$0xff]
    %v108 = vld [vmem:[%s2 + $0x30] sm:$0xff]
    %v109 = vld [vmem:[%s2 + $0x38] sm:$0xff]
    %v110 = vld [vmem:[%s2 + $0x40] sm:$0xff]
    %v111 = vld [vmem:[%s2 + $0x48] sm:$0xff]
    %v112 = vld [vmem:[%s2 + $0x50] sm:$0xff]
    %v113 = vld [vmem:[%s2 + $0x58] sm:$0xff]
    %v114 = vld [vmem:[%s2 + $0x60] sm:$0xff]
    %v115 = vld [vmem:[%s2 + $0x68] sm:$0xff]
    %v116 = vld [vmem:[%s2 + $0x70] sm:$0xff]
    %v117 = vld [vmem:[%s2 + $0x78] sm:$0xff]
    %118 = vmatprep.subr.mxu0 0.0
    %119 = vmatpush1.msra.mxu0 %v102
    %120 = vmatprep.subr.mxu0 0.0
    %121 = vmatpush1.msra.mxu0 %v103
    %122 = vmatprep.subr.mxu0 0.0
    %123 = vmatpush1.msra.mxu0 %v104
    %124 = vmatprep.subr.mxu0 0.0
    %125 = vmatpush1.msra.mxu0 %v105
    %126 = vmatprep.subr.mxu0 0.0
    %127 = vmatpush1.msra.mxu0 %v106
    %128 = vmatprep.subr.mxu0 0.0
    %129 = vmatpush1.msra.mxu0 %v107
    %130 = vmatprep.subr.mxu0 0.0
    %131 = vmatpush1.msra.mxu0 %v108
    %132 = vmatprep.subr.mxu0 0.0
    %133 = vmatpush1.msra.mxu0 %v109
    %134 = vmatprep.subr.mxu0 0.0
    %135 = vmatpush1.msra.mxu0 %v110
    %136 = vmatprep.subr.mxu0 0.0
    %137 = vmatpush1.msra.mxu0 %v111
    %138 = vmatprep.subr.mxu0 0.0
    %139 = vmatpush1.msra.mxu0 %v112
    %140 = vmatprep.subr.mxu0 0.0
    %141 = vmatpush1.msra.mxu0 %v113
    %142 = vmatprep.subr.mxu0 0.0
    %143 = vmatpush1.msra.mxu0 %v114
    %144 = vmatprep.subr.mxu0 0.0
    %145 = vmatpush1.msra.mxu0 %v115
    %146 = vmatprep.subr.mxu0 0.0
    %147 = vmatpush1.msra.mxu0 %v116
    %148 = vmatprep.subr.mxu0 0.0
    %149 = vmatpush1.msra.mxu0 %v117
    %150 = vmatprep.subr.mxu0 0.0
    %151 = vmatpush1.msra.mxu0 0.0
    %152 = vmatprep.subr.mxu0 0.0
    %153 = vmatpush1.msra.mxu0 0.0
    %154 = vmatprep.subr.mxu0 0.0
    %155 = vmatpush1.msra.mxu0 0.0
    %156 = vmatprep.subr.mxu0 0.0
    %157 = vmatpush1.msra.mxu0 0.0
    %158 = vmatprep.subr.mxu0 0.0
    %159 = vmatpush1.msra.mxu0 0.0
    %160 = vmatprep.subr.mxu0 0.0
    %161 = vmatpush1.msra.mxu0 0.0
    %162 = vmatprep.subr.mxu0 0.0
    %163 = vmatpush1.msra.mxu0 0.0
    %164 = vmatprep.subr.mxu0 0.0
    %165 = vmatpush1.msra.mxu0 0.0
    %166 = vmatprep.subr.mxu0 0.0
    %167 = vmatpush1.msra.mxu0 0.0
    %168 = vmatprep.subr.mxu0 0.0
    %169 = vmatpush1.msra.mxu0 0.0
    %170 = vmatprep.subr.mxu0 0.0
    %171 = vmatpush1.msra.mxu0 0.0
    %172 = vmatprep.subr.mxu0 0.0
    %173 = vmatpush1.msra.mxu0 0.0
    %174 = vmatprep.subr.mxu0 0.0
    %175 = vmatpush1.msra.mxu0 0.0
    %176 = vmatprep.subr.mxu0 0.0
    %177 = vmatpush1.msra.mxu0 0.0
    %178 = vmatprep.subr.mxu0 0.0
    %179 = vmatpush1.msra.mxu0 0.0
    %180 = vmatprep.subr.mxu0 0.0
    %181 = vmatpush1.msra.mxu0 0.0
    %182 = vmatprep.mubr.f32.mxu0 0.0
    %183 = vmatmul.mubr.f32.gmra.mrb[0].mxu0 %v101
    %v184 = vpop.f32.mrb[0].mxu0
    %v185 = vadd.f32 0.0, %v184
    %v186 = vpop.f32.mrb[0].mxu0
    %187 = vdwg.mxu0
    %v188 = vxor.u32 %v185, 2147483648
    %v189 = vmul.f32 %v188, 1.442695
    %v190 = vpow.pop %v189
    %v191 = vadd.f32 %v190, 1.0
    %v192 = vrcp.pop %v191
    %v193 = vmul.f32 1.0, %v192
    %v194 = vsel %vm27, %v193, 0.0
    %195 = vadd.xlane.f32.xlu0 %v194
    %v196 = vpop.xlane.xlu0 %195
    %v197 = vrcp.pop 64.0
    %v198 = vmul.f32 %v196, %v197
    %v199 = vsub.f32 %v193, %v198
    %v200 = vmul.f32 %v199, %v199
    %v201 = vsel %vm27, %v200, 0.0
    %202 = vadd.xlane.f32.xlu0 %v201
    %v203 = vpop.xlane.xlu0 %202
    %v204 = vmul.f32 %v203, %v197
    %v205 = vld [vmem:[%s3] sm:$0x1]
    %v206 = vld [vmem:[%s3 + $0x1] sm:$0x1]
    %v207 = vadd.f32 %v204, 1e-06
    %v208 = vrsqrt.pop %v207
    %v209 = vmul.f32 %v199, %v208
    %v210 = vlaneseq
    %v211 = vshrl.u32 %v210, 7
    %v212 = vsub.s32 0, %v211
    %v213 = vrot.slane %v205, %v212
    %v214 = vmul.f32 %v209, %v213
    %v215 = vlaneseq
    %v216 = vshrl.u32 %v215, 7
    %v217 = vsub.s32 0, %v216
    %v218 = vrot.slane %v206, %v217
    %v219 = vadd.f32 %v214, %v218
    %v220 = vmul.f32 %v18, %v219
    %221 = vst.msk [vmem:[#allocation2] sm:$0xff] %vm27, %v220
    // Predicated region
    $region18: #{tpu_custom_call.1} parent=1 // pred_check
      _
    $region19: #{tpu_custom_call.1} parent=1 // pred_check_branch
      %223 = sbr.rel (0) target = $region21
    $region20: #{tpu_custom_call.1} parent=1 // pred_region
      %s225 = ssub.s32 128, 128
      %226 = vsyncadd [#allocation3], %s225
      %s228 = sshll.u32 [#allocation2], 4
      %s229 = int_to_ptr.vmem [resolvable:$true] %s228
      %231 = dma.vmem_to_hbm [thread:$0]  %s229, 128, %s4, [#allocation3]
    $region21: #{tpu_custom_call.1} parent=1 // pred_fallthru
      _
    // Predicated region
    $region22: #{tpu_custom_call.1} parent=1 // pred_check
      _
    $region23: #{tpu_custom_call.1} parent=1 // pred_check_branch
      %233 = sbr.rel (0) target = $region25
    $region24: #{tpu_custom_call.1} parent=1 // pred_region
      %234 = dma.done [#allocation3], 128
    $region25: #{tpu_custom_call.1} parent=1 // pred_fallthru
      _
    %235 = vsyncpa [#allocation3], 1

</llo_original>
